<compile_context>
chip_gen: v5e
topology: v5e:2x2
jax: 0.10.0
libtpu: 0.0.40
codegen_flags: <defaults>
</compile_context>

<pallas_src>
import jax
import jax.numpy as jnp
from jax.experimental import pallas as pl
from jax.experimental.pallas import tpu as pltpu


def _round_up(a, m):
    return ((a + m - 1) // m) * m


def _h_sigmoid_ref(x):
    """Pure-jnp reference (matches the PyTorch module exactly)."""
    y = jnp.clip(x.astype(jnp.float32) + 3.0, 0.0, 6.0) / 6.0
    return y.astype(x.dtype)


def _make_kernel(compute_dtype):
    def kernel(x_ref, o_ref):
        x = x_ref[...].astype(compute_dtype)
        # relu6(x + 3) / 6  ==  clip(x + 3, 0, 6) * (1/6)   (VPU only)
        y = jnp.clip(x + 3.0, 0.0, 6.0) * (1.0 / 6.0)
        o_ref[...] = y.astype(o_ref.dtype)
    return kernel


def _chip_config():
    """Returns (block_bytes, vmem_limit_bytes, native_16bit_vpu, multi_core)."""
    try:
        kind = jax.devices()[0].device_kind.lower()
    except Exception:
        kind = ""
    if "v7" in kind or "7x" in kind:
        # 64 MiB physical VMEM / ~3.2 TB/s HBM, 2 TensorCores per chip.
        return 4 << 20, 32 << 20, True, True
    if "v6" in kind:
        # 128 MiB physical VMEM / ~1.4 TB/s HBM.
        return 6 << 20, 64 << 20, True, False
    if "v5" in kind or "v4" in kind:
        # 128 MiB physical VMEM / ~0.8 TB/s HBM; no bf16 VALU -> compute in f32.
        return 6 << 20, 64 << 20, False, False
    # Unknown generation: v7x-safe conservative defaults.
    return 2 << 20, 32 << 20, False, True


def _pallas_apply_2d(x2d, compute_dtype, block_bytes, vmem_limit, multi_core):
    """Run the elementwise kernel over a 2-D view, tiling rows (and columns if
    a single row is too wide).  Ragged tails are masked by Pallas (cdiv grid)."""
    R, C = x2d.shape
    dtype = x2d.dtype
    itemsize = jnp.dtype(dtype).itemsize
    sub = max(8, (4 // itemsize) * 8)           # packed-sublane multiple per dtype
    total_bytes = R * C * itemsize

    # ---- column (lane) blocking --------------------------------------------
    padded_row_bytes = _round_up(C, 128) * itemsize       # VMEM footprint of one row
    if padded_row_bytes * sub <= block_bytes:
        bc, ncols = C, 1                        # full extent: legal for any C
    else:
        rows_for_budget = _round_up(min(R, sub), 8)
        bc = (block_bytes // (rows_for_budget * itemsize)) // 128 * 128
        bc = max(128, min(bc, _round_up(C, 128)))
        ncols = pl.cdiv(C, bc)                  # ragged last column block is masked

    # ---- row (sublane) blocking ---------------------------------------------
    padded_block_row_bytes = _round_up(bc, 128) * itemsize
    tr = max(sub, (block_bytes // padded_block_row_bytes) // sub * sub)
    n_row_steps = pl.cdiv(R, tr) if R > tr else 1
    if multi_core and total_bytes > (1 << 20) and R > sub and ncols == 1:
        # v7x megacore: >= 2 (even) steps so both TensorCores get balanced work.
        n_row_steps = max(n_row_steps, 2)
        if n_row_steps % 2:
            n_row_steps += 1
    if n_row_steps <= 1 or R <= sub:
        br, nrows = R, 1                        # full extent: legal for any R
    else:
        br = _round_up(pl.cdiv(R, n_row_steps), sub)
        if br >= R:
            br, nrows = R, 1
        else:
            nrows = pl.cdiv(R, br)              # ragged last row block is masked

    n = R * C
    out2d = pl.pallas_call(
        _make_kernel(compute_dtype),
        out_shape=jax.ShapeDtypeStruct((R, C), dtype),
        grid_spec=pltpu.PrefetchScalarGridSpec(
            num_scalar_prefetch=0,
            grid=(nrows, ncols),
            in_specs=[pl.BlockSpec((br, bc), lambda i, j: (i, j))],
            out_specs=pl.BlockSpec((br, bc), lambda i, j: (i, j)),
        ),
        compiler_params=pltpu.CompilerParams(
            dimension_semantics=("parallel", "parallel"),   # shards across TCs on v7x
            vmem_limit_bytes=vmem_limit,
        ),
        cost_estimate=pl.CostEstimate(
            flops=4 * n,                        # add, max, min, mul
            transcendentals=0,
            bytes_accessed=2 * n * itemsize,
        ),
    )(x2d)
    return out2d


def h_sigmoid(x, *, min_pallas_bytes=256 * 1024):
    """h_sigmoid(x) = relu6(x + 3) / 6, elementwise.  Any shape / float dtype."""
    orig_shape = x.shape
    dtype = x.dtype
    n = x.size
    itemsize = jnp.dtype(dtype).itemsize

    block_bytes, vmem_limit, native16, multi_core = _chip_config()

    # Small-input fast path: custom-call launch overhead dominates below a few
    # hundred KiB; XLA's fused elementwise op is strictly better there.
    if n == 0 or x.ndim == 0 or n < 128 or n * itemsize < min_pallas_bytes:
        return _h_sigmoid_ref(x)

    # Compute dtype: native 16-bit VPU math on v6e/v7x, f32 elsewhere (v5e).
    if native16 and (dtype == jnp.bfloat16 or dtype == jnp.float16):
        compute_dtype = dtype
    else:
        compute_dtype = jnp.float32

    if n % 128 == 0:
        # Lane-dense slab: widest W in {2048..128} dividing n (no pad needed).
        for W in (2048, 1024, 512, 256, 128):
            if n % W == 0:
                break
        x2d = jnp.ravel(x).reshape(n // W, W)        # free reshape (contiguous)
    else:
        # Ragged numel: NO host-side pad / output slice (each would be an extra
        # full HBM pass that cannot fuse with the custom call).  Collapse
        # trailing dims into the lane axis (free reshape); Pallas masks tails.
        C = 1
        for d in reversed(orig_shape):
            if C * d > 4096 and C > 1:
                break
            C *= int(d)
        x2d = jnp.ravel(x).reshape(n // C, C)        # free reshape (contiguous)

    out2d = _pallas_apply_2d(x2d, compute_dtype, block_bytes, vmem_limit,
                             multi_core)
    return out2d.reshape(orig_shape)


if __name__ == "__main__":
    key = jax.random.PRNGKey(0)

    # NCHW input consistent with the conv-style module: batch=2, channels=4, 16x16.
    x = jax.random.normal(key, (2, 4, 16, 16), dtype=jnp.float32) * 4.0

    # Default call: tiny input takes the fused-jnp fast path (same semantics).
    y_fast = jax.block_until_ready(h_sigmoid(x))
    assert y_fast.shape == x.shape and y_fast.dtype == x.dtype
    assert jnp.allclose(y_fast, _h_sigmoid_ref(x), atol=1e-6, rtol=1e-6)

    # Force the Pallas path on the same small input (correctness of the kernel).
    y = jax.block_until_ready(h_sigmoid(x, min_pallas_bytes=0))
    assert y.shape == x.shape and y.dtype == x.dtype
    assert jnp.allclose(y, _h_sigmoid_ref(x), atol=1e-6, rtol=1e-6)

    # Larger 128-aligned input (2 MiB): multi-step lane-dense slab path.
    k1 = jax.random.PRNGKey(1)
    x1 = jax.random.normal(k1, (8, 16, 64, 64), dtype=jnp.float32) * 4.0
    y1 = jax.block_until_ready(h_sigmoid(x1))
    assert jnp.allclose(y1, _h_sigmoid_ref(x1), atol=1e-6, rtol=1e-6)

    # Ragged numel (not a multiple of 128): no host-side pad/slice, masked tail.
    k2 = jax.random.PRNGKey(2)
    x2 = jax.random.normal(k2, (3, 5, 7, 11), dtype=jnp.float32) * 4.0
    y2 = jax.block_until_ready(h_sigmoid(x2, min_pallas_bytes=0))
    assert y2.shape == x2.shape
    assert jnp.allclose(y2, _h_sigmoid_ref(x2), atol=1e-6, rtol=1e-6)

    # bf16: native bf16 VPU compute on v6e/v7x, f32 upcast on v5e/unknown.
    x3 = x1.astype(jnp.bfloat16)
    y3 = jax.block_until_ready(h_sigmoid(x3))
    assert y3.dtype == jnp.bfloat16
    assert jnp.allclose(y3.astype(jnp.float32),
                        _h_sigmoid_ref(x3).astype(jnp.float32),
                        atol=2e-2, rtol=2e-2)

    print("KERNEL_OK")
</pallas_src>

<mosaic_0001>
module attributes {stable_mosaic.version = 11 : i64} {
  func.func @kernel(%arg0: i32, %arg1: i32, %arg2: memref<1x2048xf32, #tpu.memory_space<vmem>>, %arg3: memref<1x2048xf32, #tpu.memory_space<vmem>>) attributes {dimension_semantics = [#tpu.dimension_semantics<parallel>, #tpu.dimension_semantics<parallel>], iteration_bounds = array<i64: 1, 1>, scalar_prefetch = 0 : i64, scratch_operands = 0 : i64, tpu.core_type = #tpu.core_type<tc>, window_params = [{transform_indices = @transform_0, window_bounds = array<i64: 1, 2048>}, {transform_indices = @transform_1, window_bounds = array<i64: 1, 2048>}]} {
    %c0 = arith.constant 0 : index
    %c0_0 = arith.constant 0 : index
    %0 = vector.load %arg2[%c0, %c0_0] : memref<1x2048xf32, #tpu.memory_space<vmem>>, vector<1x2048xf32>
    %cst = arith.constant 3.000000e+00 : f32
    %1 = vector.broadcast %cst : f32 to vector<1x2048xf32>
    %2 = arith.addf %0, %1 : vector<1x2048xf32>
    %cst_1 = arith.constant 0.000000e+00 : f32
    %cst_2 = arith.constant 6.000000e+00 : f32
    %3 = vector.broadcast %cst_1 : f32 to vector<1x2048xf32>
    %4 = arith.maximumf %3, %2 : vector<1x2048xf32>
    %5 = vector.broadcast %cst_2 : f32 to vector<1x2048xf32>
    %6 = arith.minimumf %5, %4 : vector<1x2048xf32>
    %cst_3 = arith.constant 0.166666672 : f32
    %7 = vector.broadcast %cst_3 : f32 to vector<1x2048xf32>
    %8 = arith.mulf %6, %7 : vector<1x2048xf32>
    %c0_4 = arith.constant 0 : index
    %c0_5 = arith.constant 0 : index
    %9 = vector.load %arg3[%c0_4, %c0_5] : memref<1x2048xf32, #tpu.memory_space<vmem>>, vector<1x2048xf32>
    tpu.vector_store %arg3[%c0_4, %c0_5], %8 {strides = array<i32>} : memref<1x2048xf32, #tpu.memory_space<vmem>>, vector<1x2048xf32>,
    return
  }
  func.func @transform_0(%arg0: i32, %arg1: i32) -> (i32, i32) {
    %c0_i32 = arith.constant 0 : i32
    return %arg0, %arg1 : i32, i32
  }
  func.func @transform_1(%arg0: i32, %arg1: i32) -> (i32, i32) {
    %c0_i32 = arith.constant 0 : i32
    return %arg0, %arg1 : i32, i32
  }
}

</mosaic_0001>

<llo_original>
// kernel: tpu_custom_call.1
$region0: #{tpu_custom_call.1}
  #allocation0 [shape = 'u32[]', space=smem, size = 0x4, offset = 0x4, fixed_abs, tag = 'smem constant byte address 0x4 - core index']
  #allocation1 [shape = 'u32[72,128]{1,0:T(1,128)}', space=vmem, size = 0x9000, scoped, tag = 'internal scratch']
  %s0 = inlined_call_operand.hbm [shape: f32[1,2048], index: 0, kind: input, shape index: {}]
  %s1 = inlined_call_operand.hbm [shape: f32[1,2048], index: 1, kind: output, shape index: {}]
  %s2 = sld [smem:[#allocation0]]
  $region18: #{tpu_custom_call.1} parent=0
    _
  %s4 = ssub.s32 1, %s2
  %s5 = scalar_select 0, %s4, %s2
  $region1: #{tpu_custom_call.1} parent=0
    #allocation2 [shape = 'u8[8192]{0}', space=vmem, size = 0x2000, scoped, tag = 'input window, operand 0, single buffered']
    #allocation3 [shape = 's32[1]{0}', space=sflag, size = 0x4, scoped, tag = 'scoped memory for tpu_custom_call.1']
    #allocation4 [shape = 's32[1]{0}', space=sflag, size = 0x4, scoped, tag = 'scoped memory for tpu_custom_call.1']
    #allocation5 [shape = 'u8[8192]{0}', space=vmem, size = 0x2000, scoped, tag = 'output window, operand 0, single buffered']
    %6 = vsyncpa [#allocation3], 0
    %7 = vsyncpa [#allocation4], 0
    // Predicated region
    $region2: #{tpu_custom_call.1} parent=1 // pred_check
      _
    $region3: #{tpu_custom_call.1} parent=1 // pred_check_branch
      %9 = sbr.rel (0) target = $region5
    $region4: #{tpu_custom_call.1} parent=1 // pred_region
      %11 = vsyncadd [#allocation3], 0
      %s13 = sshll.u32 %s0, 4
      %s14 = int_to_ptr.hbm [resolvable:$true] %s13
      %s15 = sshll.u32 [#allocation2], 4
      %s16 = int_to_ptr.vmem [resolvable:$true] %s15
      %18 = dma.hbm_to_vmem [thread:$0]  %s14, 256, %s16, [#allocation3]
    $region5: #{tpu_custom_call.1} parent=1 // pred_fallthru
      _
    // Predicated region
    $region6: #{tpu_custom_call.1} parent=1 // pred_check
      _
    $region7: #{tpu_custom_call.1} parent=1 // pred_check_branch
      %20 = sbr.rel (0) target = $region9
    $region8: #{tpu_custom_call.1} parent=1 // pred_region
      %22 = dma.done [#allocation3], 256
    $region9: #{tpu_custom_call.1} parent=1 // pred_fallthru
      _
    %v23 = vld [vmem:[#allocation2] sm:$0xff]
    %v24 = vld [vmem:[#allocation2 + $0x8] sm:$0xff]
    %v25 = vadd.f32 %v23, 3.0
    %v26 = vadd.f32 %v24, 3.0
    %v27 = vmax.f32 %v25, 0.0
    %v28 = vmax.f32 %v26, 0.0
    %v29 = vmin.f32 %v27, 6.0
    %v30 = vmin.f32 %v28, 6.0
    %v31 = vmul.f32 %v29, 0.16666667
    %v32 = vmul.f32 %v30, 0.16666667
    %33 = vst [vmem:[#allocation5] sm:$0xff] %v31
    %34 = vst [vmem:[#allocation5 + $0x8] sm:$0xff] %v32
    // Predicated region
    $region10: #{tpu_custom_call.1} parent=1 // pred_check
      _
    $region11: #{tpu_custom_call.1} parent=1 // pred_check_branch
      %36 = sbr.rel (0) target = $region13
    $region12: #{tpu_custom_call.1} parent=1 // pred_region
      %38 = vsyncadd [#allocation4], 0
      %s40 = sshll.u32 [#allocation5], 4
      %s41 = int_to_ptr.vmem [resolvable:$true] %s40
      %s42 = sshll.u32 %s1, 4
      %s43 = int_to_ptr.hbm [resolvable:$true] %s42
      %45 = dma.vmem_to_hbm [thread:$0]  %s41, 256, %s43, [#allocation4]
    $region13: #{tpu_custom_call.1} parent=1 // pred_fallthru
      _
    // Predicated region
    $region14: #{tpu_custom_call.1} parent=1 // pred_check
      _
    $region15: #{tpu_custom_call.1} parent=1 // pred_check_branch
      %47 = sbr.rel (0) target = $region17
    $region16: #{tpu_custom_call.1} parent=1 // pred_region
      %49 = dma.done [#allocation4], 256
    $region17: #{tpu_custom_call.1} parent=1 // pred_fallthru
      _
    %50 = vsyncpa [#allocation3], 1
    %51 = vsyncpa [#allocation4], 1

</llo_original>
